<compile_context>
chip_gen: v6e
topology: v6e:2x2x1
jax: 0.10.0
libtpu: 0.0.40
codegen_flags: <defaults>
</compile_context>

<pallas_src>
import functools

import jax
import jax.numpy as jnp
from jax.experimental import pallas as pl
from jax.experimental.pallas import tpu as pltpu

IN_FEATURES = 256
OUT_FEATURES = 2


def _device_kind():
    try:
        return jax.devices()[0].device_kind.lower()
    except Exception:
        return ""


_DEVICE_KIND = _device_kind()
_HAS_TWO_TENSORCORES = "v7" in _DEVICE_KIND  # v7x: 2 TensorCores per chip


def _default_block_b():
    # HBM-stream-bound kernel: pick the batch tile per generation so the
    # per-tile DMA time dominates the ~0.35 us fixed grid-step overhead.
    if "v7" in _DEVICE_KIND:
        return 8192
    if "v6" in _DEVICE_KIND:
        return 4096
    return 2048  # v5e and unknown/CPU-interpret fallbacks


DEFAULT_TB = _default_block_b()


def _round_up(x, m):
    return ((x + m - 1) // m) * m


def _choose_tb(B, block_b):
    """Pick the batch tile: multiple of 8 (or == B), <= block_b.

    On dual-TensorCore chips, split moderate batches in two so the "parallel"
    grid axis gives both cores work (grid_b >= 2)."""
    if B <= block_b:
        if _HAS_TWO_TENSORCORES and B >= 256:
            return min(_round_up((B + 1) // 2, 8), block_b)
        return B
    return block_b


def _vmem_limit_bytes(tb, x_dtype):
    x_bytes = jnp.dtype(x_dtype).itemsize
    xbuf = 2 * tb * IN_FEATURES * x_bytes          # double-buffered x tiles
    obuf = 2 * tb * 128 * 4                        # (tb, 2) lane-pads to 128 in VMEM
    acc = tb * 128 * 4                             # f32 matmul result temp
    wbuf = 2 * (IN_FEATURES * 128 * 4 + 128 * 4)   # weight + bias (lane-padded), x2 buffers
    total = int((xbuf + obuf + acc + wbuf) * 1.25) # 25% headroom
    # Keep within the smallest physical VMEM (v7x: 64 MiB/TC) and at least the
    # smallest scoped default so tiny tiles never under-provision Mosaic.
    return max(min(total, 64 * 1024 * 1024), 16 * 1024 * 1024)


def _linear_kernel(x_ref, w_ref, b_ref, o_ref):
    # x_ref: (TB, 256)  w_ref: (256, 2)  b_ref: (1, 2)  o_ref: (TB, 2)
    acc = jnp.dot(x_ref[...], w_ref[...], preferred_element_type=jnp.float32)
    o_ref[...] = (acc + b_ref[...]).astype(o_ref.dtype)


def prepare_params(weight, bias):
    """One-time param prep (hoisted out of the per-call path).

    weight: (2, 256) PyTorch layout; bias: (2,).
    Returns float32 (256, 2) transposed weight and (1, 2) bias row.
    """
    w_t = weight.astype(jnp.float32).T                    # (256, 2)
    b_row = bias.astype(jnp.float32).reshape(1, OUT_FEATURES)
    return w_t, b_row


@functools.partial(jax.jit, static_argnames=("block_b",))
def classifier_forward(x, w_t, b_row, block_b=DEFAULT_TB):
    """x: (B, 256); w_t: (256, 2) f32; b_row: (1, 2) f32 -> (B, 2) in x.dtype."""
    B = x.shape[0]
    tb = _choose_tb(B, block_b)
    grid_b = pl.cdiv(B, tb)
    x_bytes = jnp.dtype(x.dtype).itemsize

    cost = pl.CostEstimate(
        flops=2 * B * IN_FEATURES * OUT_FEATURES,          # useful FLOPs only
        transcendentals=0,
        bytes_accessed=B * IN_FEATURES * x_bytes
        + B * OUT_FEATURES * x_bytes
        + IN_FEATURES * OUT_FEATURES * 4
        + OUT_FEATURES * 4,
    )

    return pl.pallas_call(
        _linear_kernel,
        out_shape=jax.ShapeDtypeStruct((B, OUT_FEATURES), x.dtype),
        grid_spec=pltpu.PrefetchScalarGridSpec(
            num_scalar_prefetch=0,
            grid=(grid_b,),
            in_specs=[
                pl.BlockSpec((tb, IN_FEATURES), lambda i: (i, 0)),
                pl.BlockSpec((IN_FEATURES, OUT_FEATURES), lambda i: (0, 0)),
                pl.BlockSpec((1, OUT_FEATURES), lambda i: (0, 0)),
            ],
            out_specs=pl.BlockSpec((tb, OUT_FEATURES), lambda i: (i, 0)),
        ),
        compiler_params=pltpu.CompilerParams(
            dimension_semantics=("parallel",),  # batch tiles shard across TCs on v7x
            vmem_limit_bytes=_vmem_limit_bytes(tb, x.dtype),
        ),
        cost_estimate=cost,
    )(x, w_t, b_row)


def init_params(key):
    # Deterministic init mirroring nn.Linear's default (uniform +-1/sqrt(fan_in)).
    kw, kb = jax.random.split(key)
    bound = 1.0 / jnp.sqrt(jnp.float32(IN_FEATURES))
    weight = jax.random.uniform(kw, (OUT_FEATURES, IN_FEATURES),
                                dtype=jnp.float32, minval=-bound, maxval=bound)
    bias = jax.random.uniform(kb, (OUT_FEATURES,),
                              dtype=jnp.float32, minval=-bound, maxval=bound)
    return weight, bias


if __name__ == "__main__":
    key = jax.random.PRNGKey(0)
    k_x, k_x2, k_p = jax.random.split(key, 3)

    weight, bias = init_params(k_p)
    w_t, b_row = prepare_params(weight, bias)   # hoisted, one-time

    # Small-shape check (single grid step; block equals full batch dim).
    B = 4
    x = jax.random.normal(k_x, (B, IN_FEATURES), dtype=jnp.float32)
    out = classifier_forward(x, w_t, b_row)
    jax.block_until_ready(out)
    ref = x @ weight.T + bias
    assert out.shape == (B, OUT_FEATURES), out.shape
    assert jnp.allclose(out, ref, atol=1e-5, rtol=1e-5), "mismatch vs reference (B=4)"

    # Multi-tile check with a partial final tile (forces grid >= 2 via block_b=256).
    B2 = 640
    x2 = jax.random.normal(k_x2, (B2, IN_FEATURES), dtype=jnp.float32)
    out2 = classifier_forward(x2, w_t, b_row, block_b=256)
    jax.block_until_ready(out2)
    ref2 = x2 @ weight.T + bias
    assert out2.shape == (B2, OUT_FEATURES), out2.shape
    assert jnp.allclose(out2, ref2, atol=1e-4, rtol=1e-5), "mismatch vs reference (B=640)"

    print("KERNEL_OK")
</pallas_src>

<mosaic_0001>
module attributes {stable_mosaic.version = 11 : i64} {
  func.func @_linear_kernel(%arg0: i32, %arg1: memref<4x256xf32, #tpu.memory_space<vmem>>, %arg2: memref<256x2xf32, #tpu.memory_space<vmem>>, %arg3: memref<1x2xf32, #tpu.memory_space<vmem>>, %arg4: memref<4x2xf32, #tpu.memory_space<vmem>>) attributes {dimension_semantics = [#tpu.dimension_semantics<parallel>], iteration_bounds = array<i64: 1>, scalar_prefetch = 0 : i64, scratch_operands = 0 : i64, tpu.core_type = #tpu.core_type<tc>, window_params = [{transform_indices = @transform_0, window_bounds = array<i64: 4, 256>}, {pipeline_mode = #tpu.pipeline_mode<synchronous>, transform_indices = @transform_1, window_bounds = array<i64: 256, 2>}, {pipeline_mode = #tpu.pipeline_mode<synchronous>, transform_indices = @transform_2, window_bounds = array<i64: 1, 2>}, {transform_indices = @transform_3, window_bounds = array<i64: 4, 2>}]} {
    %c0 = arith.constant 0 : index
    %c0_0 = arith.constant 0 : index
    %0 = vector.load %arg1[%c0, %c0_0] : memref<4x256xf32, #tpu.memory_space<vmem>>, vector<4x256xf32>
    %c0_1 = arith.constant 0 : index
    %c0_2 = arith.constant 0 : index
    %1 = vector.load %arg2[%c0_1, %c0_2] : memref<256x2xf32, #tpu.memory_space<vmem>>, vector<256x2xf32>
    %cst = arith.constant dense<0.000000e+00> : vector<4x2xf32>
    %2 = tpu.matmul %0, %1, %cst {dimension_numbers = #tpu.dot_dimension_numbers<[1], [0], [0], [1], [0, 0, 1, 1], [], []>} : vector<4x256xf32>, vector<256x2xf32>, vector<4x2xf32> -> vector<4x2xf32>
    %c0_3 = arith.constant 0 : index
    %c0_4 = arith.constant 0 : index
    %3 = vector.load %arg3[%c0_3, %c0_4] : memref<1x2xf32, #tpu.memory_space<vmem>>, vector<1x2xf32>
    %4 = vector.broadcast %3 : vector<1x2xf32> to vector<4x2xf32>
    %5 = arith.addf %2, %4 : vector<4x2xf32>
    %c0_5 = arith.constant 0 : index
    %c0_6 = arith.constant 0 : index
    %6 = vector.load %arg4[%c0_5, %c0_6] : memref<4x2xf32, #tpu.memory_space<vmem>>, vector<4x2xf32>
    tpu.vector_store %arg4[%c0_5, %c0_6], %5 {strides = array<i32>} : memref<4x2xf32, #tpu.memory_space<vmem>>, vector<4x2xf32>,
    return
  }
  func.func @transform_0(%arg0: i32) -> (i32, i32) {
    %c0_i32 = arith.constant 0 : i32
    %c0_i32_0 = arith.constant 0 : i32
    return %arg0, %c0_i32 : i32, i32
  }
  func.func @transform_1(%arg0: i32) -> (i32, i32) {
    %c0_i32 = arith.constant 0 : i32
    %c0_i32_0 = arith.constant 0 : i32
    %c0_i32_1 = arith.constant 0 : i32
    return %c0_i32, %c0_i32_0 : i32, i32
  }
  func.func @transform_2(%arg0: i32) -> (i32, i32) {
    %c0_i32 = arith.constant 0 : i32
    %c0_i32_0 = arith.constant 0 : i32
    %c0_i32_1 = arith.constant 0 : i32
    return %c0_i32, %c0_i32_0 : i32, i32
  }
  func.func @transform_3(%arg0: i32) -> (i32, i32) {
    %c0_i32 = arith.constant 0 : i32
    %c0_i32_0 = arith.constant 0 : i32
    return %arg0, %c0_i32 : i32, i32
  }
}

</mosaic_0001>

<llo_original>
// kernel: classifier_forward.1
$region0: #{classifier_forward.1}
  #allocation0 [shape = 'u32[]', space=smem, size = 0x4, offset = 0x4, fixed_abs, tag = 'smem constant byte address 0x4 - core index']
  #allocation1 [shape = 'u32[144,128]{1,0:T(1,128)}', space=vmem, size = 0x12000, scoped, tag = 'internal scratch']
  %s0 = inlined_call_operand.vmem [shape: f32[4,256], index: 0, kind: input, shape index: {}]
  %s1 = inlined_call_operand.vmem [shape: f32[256,2], index: 1, kind: input, shape index: {}]
  %s2 = inlined_call_operand.vmem [shape: f32[1,2], index: 2, kind: input, shape index: {}]
  %s3 = inlined_call_operand.vmem [shape: f32[4,2], index: 3, kind: output, shape index: {}]
  %s4 = sld [smem:[#allocation0]]
  $region22: #{classifier_forward.1} parent=0
    _
  %s6 = ssub.s32 1, %s4
  %s7 = scalar_select 0, %s6, %s4
  // Predicated region
  $region2: #{classifier_forward.1} parent=0 // pred_check
    _
  $region3: #{classifier_forward.1} parent=0 // pred_check_branch
    %9 = sbr.rel (0) target = $region5
  $region4: #{classifier_forward.1} parent=0 // pred_region
    _
  $region5: #{classifier_forward.1} parent=0 // pred_fallthru
    _
  // Predicated region
  $region6: #{classifier_forward.1} parent=0 // pred_check
    _
  $region7: #{classifier_forward.1} parent=0 // pred_check_branch
    %11 = sbr.rel (0) target = $region9
  $region8: #{classifier_forward.1} parent=0 // pred_region
    _
  $region9: #{classifier_forward.1} parent=0 // pred_fallthru
    _
  // Predicated region
  $region10: #{classifier_forward.1} parent=0 // pred_check
    _
  $region11: #{classifier_forward.1} parent=0 // pred_check_branch
    %13 = sbr.rel (0) target = $region13
  $region12: #{classifier_forward.1} parent=0 // pred_region
    _
  $region13: #{classifier_forward.1} parent=0 // pred_fallthru
    _
  %v14 = vld [vmem:[%s0] sm:$0xff]
  %v15 = vld [vmem:[%s1] sm:$0xff]
  %v16 = vld [vmem:[%s1 + $0x8] sm:$0xff]
  %v17 = vld [vmem:[%s1 + $0x10] sm:$0xff]
  %v18 = vld [vmem:[%s1 + $0x18] sm:$0xff]
  %v19 = vld [vmem:[%s1 + $0x20] sm:$0xff]
  %v20 = vld [vmem:[%s1 + $0x28] sm:$0xff]
  %v21 = vld [vmem:[%s1 + $0x30] sm:$0xff]
  %v22 = vld [vmem:[%s1 + $0x38] sm:$0xff]
  %v23 = vld [vmem:[%s1 + $0x40] sm:$0xff]
  %v24 = vld [vmem:[%s1 + $0x48] sm:$0xff]
  %v25 = vld [vmem:[%s1 + $0x50] sm:$0xff]
  %v26 = vld [vmem:[%s1 + $0x58] sm:$0xff]
  %v27 = vld [vmem:[%s1 + $0x60] sm:$0xff]
  %v28 = vld [vmem:[%s1 + $0x68] sm:$0xff]
  %v29 = vld [vmem:[%s1 + $0x70] sm:$0xff]
  %v30 = vld [vmem:[%s1 + $0x78] sm:$0xff]
  %v31 = vld [vmem:[%s1 + $0x80] sm:$0xff]
  %v32 = vld [vmem:[%s1 + $0x88] sm:$0xff]
  %v33 = vld [vmem:[%s1 + $0x90] sm:$0xff]
  %v34 = vld [vmem:[%s1 + $0x98] sm:$0xff]
  %v35 = vld [vmem:[%s1 + $0xa0] sm:$0xff]
  %v36 = vld [vmem:[%s1 + $0xa8] sm:$0xff]
  %v37 = vld [vmem:[%s1 + $0xb0] sm:$0xff]
  %v38 = vld [vmem:[%s1 + $0xb8] sm:$0xff]
  %v39 = vld [vmem:[%s1 + $0xc0] sm:$0xff]
  %v40 = vld [vmem:[%s1 + $0xc8] sm:$0xff]
  %v41 = vld [vmem:[%s1 + $0xd0] sm:$0xff]
  %v42 = vld [vmem:[%s1 + $0xd8] sm:$0xff]
  %v43 = vld [vmem:[%s1 + $0xe0] sm:$0xff]
  %v44 = vld [vmem:[%s1 + $0xe8] sm:$0xff]
  %v45 = vld [vmem:[%s1 + $0xf0] sm:$0xff]
  %v46 = vld [vmem:[%s1 + $0xf8] sm:$0xff]
  %v47 = vld [vmem:[%s2] sm:$0x1]
  %v49 = vlaneseq
  %v50 = vshrl.u32 %v49, 7
  %v51 = vsub.s32 0, %v50
  %v52 = vrot.slane %v47, %v51
  %v55 = vcombine.high %v14, %v14
  %57 = vmatprep.subr.mxu0 0.0
  %58 = vmatpush1.msra.mxu0 %v30
  %59 = vmatprep.subr.mxu0 0.0
  %60 = vmatpush1.msra.mxu0 %v29
  %61 = vmatprep.subr.mxu0 0.0
  %62 = vmatpush1.msra.mxu0 %v28
  %63 = vmatprep.subr.mxu0 0.0
  %64 = vmatpush1.msra.mxu0 %v27
  %65 = vmatprep.subr.mxu0 0.0
  %66 = vmatpush1.msra.mxu0 %v26
  %67 = vmatprep.subr.mxu0 0.0
  %68 = vmatpush1.msra.mxu0 %v25
  %69 = vmatprep.subr.mxu0 0.0
  %70 = vmatpush1.msra.mxu0 %v24
  %71 = vmatprep.subr.mxu0 0.0
  %72 = vmatpush1.msra.mxu0 %v23
  %73 = vmatprep.subr.mxu0 0.0
  %74 = vmatpush1.msra.mxu0 %v22
  %75 = vmatprep.subr.mxu0 0.0
  %76 = vmatpush1.msra.mxu0 %v21
  %77 = vmatprep.subr.mxu0 0.0
  %78 = vmatpush1.msra.mxu0 %v20
  %79 = vmatprep.subr.mxu0 0.0
  %80 = vmatpush1.msra.mxu0 %v19
  %81 = vmatprep.subr.mxu0 0.0
  %82 = vmatpush1.msra.mxu0 %v18
  %83 = vmatprep.subr.mxu0 0.0
  %84 = vmatpush1.msra.mxu0 %v17
  %85 = vmatprep.subr.mxu0 0.0
  %86 = vmatpush1.msra.mxu0 %v16
  %87 = vmatprep.subr.mxu0 0.0
  %88 = vmatpush1.msra.mxu0 %v15
  %89 = vmatprep.subr.mxu0 0.0
  %90 = vmatpush2.msra.mxu0 %v46
  %91 = vmatprep.subr.mxu0 0.0
  %92 = vmatpush2.msra.mxu0 %v45
  %93 = vmatprep.subr.mxu0 0.0
  %94 = vmatpush2.msra.mxu0 %v44
  %95 = vmatprep.subr.mxu0 0.0
  %96 = vmatpush2.msra.mxu0 %v43
  %97 = vmatprep.subr.mxu0 0.0
  %98 = vmatpush2.msra.mxu0 %v42
  %99 = vmatprep.subr.mxu0 0.0
  %100 = vmatpush2.msra.mxu0 %v41
  %101 = vmatprep.subr.mxu0 0.0
  %102 = vmatpush2.msra.mxu0 %v40
  %103 = vmatprep.subr.mxu0 0.0
  %104 = vmatpush2.msra.mxu0 %v39
  %105 = vmatprep.subr.mxu0 0.0
  %106 = vmatpush2.msra.mxu0 %v38
  %107 = vmatprep.subr.mxu0 0.0
  %108 = vmatpush2.msra.mxu0 %v37
  %109 = vmatprep.subr.mxu0 0.0
  %110 = vmatpush2.msra.mxu0 %v36
  %111 = vmatprep.subr.mxu0 0.0
  %112 = vmatpush2.msra.mxu0 %v35
  %113 = vmatprep.subr.mxu0 0.0
  %114 = vmatpush2.msra.mxu0 %v34
  %115 = vmatprep.subr.mxu0 0.0
  %116 = vmatpush2.msra.mxu0 %v33
  %117 = vmatprep.subr.mxu0 0.0
  %118 = vmatpush2.msra.mxu0 %v32
  %119 = vmatprep.subr.mxu0 0.0
  %120 = vmatpush2.msra.mxu0 %v31
  %121 = vmatprep.mubr.f32.mxu0 %v55
  %122 = vmatmul.mubr.f32.gmra.mxu0 %v14
  %v123 = vpop.f32.mrf.mxu0
  %v124 = vadd.f32 %v52, %v123
  %v125 = vpop.f32.mrf.mxu0
  %126 = vdwg.mxu0
  %vm127 = vcmask 11264
  %128 = vst.msk [vmem:[%s3] sm:$0xf] %vm127, %v124
  // Predicated region
  $region14: #{classifier_forward.1} parent=0 // pred_check
    _
  $region15: #{classifier_forward.1} parent=0 // pred_check_branch
    %130 = sbr.rel (0) target = $region17
  $region16: #{classifier_forward.1} parent=0 // pred_region
    _
  $region17: #{classifier_forward.1} parent=0 // pred_fallthru
    _
  // Predicated region
  $region18: #{classifier_forward.1} parent=0 // pred_check
    _
  $region19: #{classifier_forward.1} parent=0 // pred_check_branch
    %132 = sbr.rel (0) target = $region21
  $region20: #{classifier_forward.1} parent=0 // pred_region
    _
  $region21: #{classifier_forward.1} parent=0 // pred_fallthru
    _

</llo_original>
